<compile_context>
chip_gen: v5e
topology: v5e:2x2
jax: 0.10.0
libtpu: 0.0.40
codegen_flags: <defaults>
</compile_context>

<pallas_src>
import jax
import jax.numpy as jnp
from jax.experimental import pallas as pl
from jax.experimental.pallas import tpu as pltpu


def _policy_kernel(x_ref, act_ref,
                   w1_ref, b1_ref, w2_ref, b2_ref, w3_ref, b3_ref,
                   out_ref):
    # linear1 + ReLU  (x is bf16 [TB, S+O], weights bf16, f32 accumulate)
    h = jnp.dot(x_ref[...], w1_ref[...],
                preferred_element_type=jnp.float32) + b1_ref[...]
    h = jnp.maximum(h, 0.0)

    # linear2 + ReLU
    h = jnp.dot(h.astype(jnp.bfloat16), w2_ref[...],
                preferred_element_type=jnp.float32) + b2_ref[...]
    h = jnp.maximum(h, 0.0)

    # linear3 + ReLU
    logits = jnp.dot(h.astype(jnp.bfloat16), w3_ref[...],
                     preferred_element_type=jnp.float32) + b3_ref[...]
    logits = jnp.maximum(logits, 0.0)                       # [TB, A] f32

    # log(softmax(logits)[action]) in exact log-sum-exp form:
    #   gathered_logit - m - log(sum exp(logit - m))
    m = jnp.max(logits, axis=1, keepdims=True)              # [TB, 1]
    s = jnp.sum(jnp.exp(logits - m), axis=1, keepdims=True) # [TB, 1]
    lse = m + jnp.log(s)

    tb, num_a = logits.shape
    col = jax.lax.broadcasted_iota(jnp.int32, (tb, num_a), dimension=1)
    mask = col == act_ref[...]                              # one-hot gather
    # NOTE: out-of-range action matches nothing -> gathered logit 0.0
    # (PyTorch gather would raise).  Callers must pass valid indices.
    gathered = jnp.sum(jnp.where(mask, logits, 0.0), axis=1, keepdims=True)

    # TODO(synk): lane-dense output layout ([grid, tile_b] row blocks) would
    # replace tile_b/8 masked vst.msk with dense vst; kept column layout here
    # because the (tile_b,1)->(1,tile_b) relayout is not reliably lowerable.
    out_ref[...] = gathered - lse


def _round_up(x, m):
    return (x + m - 1) // m * m


def _vmem_capacity_bytes():
    """Physical VMEM per TensorCore; falls back to 128 MiB (v5e/v6e)."""
    try:
        info = pltpu.get_tpu_info()
        cap = getattr(info, "vmem_capacity_bytes", None)
        if cap:
            return int(cap)
    except Exception:
        pass
    return 128 << 20


def seq_discrete_policy_forward(state, action, optim, params, *, tile_b=None):
    """state: [B, S] f32, action: [B, 1] int, optim: [B, O] f32 -> [B, 1] f32."""
    w1, b1, w2, b2, w3, b3 = params
    B, S = state.shape
    O = optim.shape[1]
    K = S + O
    H = w1.shape[1]
    A = w3.shape[1]

    # ---- generation-aware VMEM budget -------------------------------------
    # ~48 MiB on v7x (64 MiB physical), ~96 MiB on v5e/v6e (128 MiB physical).
    vmem_budget = min((_vmem_capacity_bytes() * 3) // 4, 96 << 20)

    # lane-padded, double-buffered per-tile bytes + in-kernel intermediates
    kl = _round_up(K, 128)
    hl = max(_round_up(H, 128), _round_up(A, 128), 128)

    def tile_vmem_bytes(t):
        feat = 2 * t * kl * 2          # bf16 features, double-buffered
        act = 2 * t * 128 * 4          # int32 action column (lane-padded)
        out = 2 * t * 128 * 4          # f32 output column (lane-padded)
        inter = 4 * t * hl * 4         # h, logits, bf16 copies, exp temp
        return feat + act + out + inter

    weight_bytes = 2 * (
        _round_up(K, 16) * _round_up(H, 128) * 2 +
        _round_up(H, 16) * _round_up(H, 128) * 2 +
        _round_up(H, 16) * _round_up(A, 128) * 2 +
        2 * 8 * _round_up(H, 128) * 4 + 8 * _round_up(A, 128) * 4)

    # ---- batch tile selection ----------------------------------------------
    desired = 2048 if tile_b is None else tile_b
    t = max(16, _round_up(min(desired, B), 16))         # multiple of 16 (bf16 sublanes)
    if B >= 32:
        # keep >= 2 grid steps so the "parallel" axis shards across v7x's 2 TCs
        t = min(t, _round_up(-(-B // 2), 16))
    while t > 16 and tile_vmem_bytes(t) + weight_bytes + (4 << 20) > vmem_budget:
        t = max(16, _round_up(t // 2, 16))

    B_pad = _round_up(B, t)
    vmem_limit = max(16 << 20,
                     min(tile_vmem_bytes(t) + weight_bytes + (8 << 20), vmem_budget))

    # ---- prepare inputs ----------------------------------------------------
    # single bf16 feature slab (no in-kernel concat / split-W1 needed)
    x = jnp.concatenate([state.astype(jnp.bfloat16),
                         optim.astype(jnp.bfloat16)], axis=1)       # [B, S+O]
    act = action.astype(jnp.int32)
    if B_pad != B:
        pad = B_pad - B
        x = jnp.pad(x, ((0, pad), (0, 0)))
        act = jnp.pad(act, ((0, pad), (0, 0)))

    w1b = w1.astype(jnp.bfloat16)
    w2b = w2.astype(jnp.bfloat16)
    w3b = w3.astype(jnp.bfloat16)
    b1f = b1.astype(jnp.float32)
    b2f = b2.astype(jnp.float32)
    b3f = b3.astype(jnp.float32)

    batch = lambda cols: pl.BlockSpec((t, cols), lambda i: (i, 0))
    resident = lambda shape: pl.BlockSpec(shape, lambda i: (0, 0))

    out = pl.pallas_call(
        _policy_kernel,
        out_shape=jax.ShapeDtypeStruct((B_pad, 1), jnp.float32),
        grid=(B_pad // t,),
        in_specs=[
            batch(K), batch(1),                           # per-tile activations
            resident((K, H)), resident((1, H)),
            resident((H, H)), resident((1, H)),
            resident((H, A)), resident((1, A)),
        ],
        out_specs=batch(1),
        compiler_params=pltpu.CompilerParams(
            dimension_semantics=("parallel",),            # v7x megacore sharding
            vmem_limit_bytes=int(vmem_limit)),
    )(x, act, w1b, b1f, w2b, b2f, w3b, b3f)
    return out[:B]


def init_params(key, state_size, optimality_input, actions, hidden_layer=128):
    # For production sizes pick hidden_layer / actions as multiples of 128 so the
    # lane axis and MXU are fully utilized; any size is *correct* here since the
    # weight blocks cover the full arrays.
    in_dim = state_size + optimality_input
    ks = jax.random.split(key, 6)

    # deterministic, PyTorch-Linear-like uniform init; weights stored [in, out]
    def uw(k, fan_in, shape):
        bound = 1.0 / jnp.sqrt(jnp.float32(fan_in))
        return jax.random.uniform(k, shape, jnp.float32, -bound, bound)

    w1 = uw(ks[0], in_dim, (in_dim, hidden_layer))
    b1 = uw(ks[1], in_dim, (1, hidden_layer))
    w2 = uw(ks[2], hidden_layer, (hidden_layer, hidden_layer))
    b2 = uw(ks[3], hidden_layer, (1, hidden_layer))
    w3 = uw(ks[4], hidden_layer, (hidden_layer, actions))
    b3 = uw(ks[5], hidden_layer, (1, actions))
    return (w1, b1, w2, b2, w3, b3)


if __name__ == "__main__":
    key = jax.random.PRNGKey(0)
    k_state, k_optim, k_act, k_params = jax.random.split(key, 4)

    B = 8
    state_size = 12
    optimality_input = 4
    actions = 8
    hidden = 32

    state = jax.random.normal(k_state, (B, state_size), jnp.float32)
    optim = jax.random.normal(k_optim, (B, optimality_input), jnp.float32)
    action = jax.random.randint(k_act, (B, 1), 0, actions, jnp.int32)

    params = init_params(k_params, state_size, optimality_input, actions, hidden)

    out = seq_discrete_policy_forward(state, action, optim, params)
    out = jax.block_until_ready(out)
    assert out.shape == (B, 1)

    # pure-JAX reference with matching arithmetic (bf16 matmul, f32 accumulate)
    w1, b1, w2, b2, w3, b3 = params

    def bdot(a, w):
        return jnp.dot(a.astype(jnp.bfloat16), w.astype(jnp.bfloat16),
                       preferred_element_type=jnp.float32)

    x_ref = jnp.concatenate([state, optim], axis=1)
    h = jnp.maximum(bdot(x_ref, w1) + b1, 0.0)
    h = jnp.maximum(bdot(h, w2) + b2, 0.0)
    logits = jnp.maximum(bdot(h, w3) + b3, 0.0)
    logp = jax.nn.log_softmax(logits, axis=1)      # exact form of log(softmax(.))
    ref = jnp.take_along_axis(logp, action, axis=1)

    assert jnp.allclose(out, ref, atol=2e-3, rtol=2e-3), (out, ref)

    print("KERNEL_OK")
</pallas_src>

<mosaic_0001>
module attributes {stable_mosaic.version = 11 : i64} {
  func.func @_policy_kernel(%arg0: i32, %arg1: memref<16x16xbf16, #tpu.memory_space<vmem>>, %arg2: memref<16x1xi32, #tpu.memory_space<vmem>>, %arg3: memref<16x32xbf16, #tpu.memory_space<vmem>>, %arg4: memref<1x32xf32, #tpu.memory_space<vmem>>, %arg5: memref<32x32xbf16, #tpu.memory_space<vmem>>, %arg6: memref<1x32xf32, #tpu.memory_space<vmem>>, %arg7: memref<32x8xbf16, #tpu.memory_space<vmem>>, %arg8: memref<1x8xf32, #tpu.memory_space<vmem>>, %arg9: memref<16x1xf32, #tpu.memory_space<vmem>>) attributes {dimension_semantics = [#tpu.dimension_semantics<parallel>], iteration_bounds = array<i64: 1>, scalar_prefetch = 0 : i64, scratch_operands = 0 : i64, tpu.core_type = #tpu.core_type<tc>, window_params = [{transform_indices = @transform_0, window_bounds = array<i64: 16, 16>}, {transform_indices = @transform_1, window_bounds = array<i64: 16, 1>}, {pipeline_mode = #tpu.pipeline_mode<synchronous>, transform_indices = @transform_2, window_bounds = array<i64: 16, 32>}, {pipeline_mode = #tpu.pipeline_mode<synchronous>, transform_indices = @transform_3, window_bounds = array<i64: 1, 32>}, {pipeline_mode = #tpu.pipeline_mode<synchronous>, transform_indices = @transform_4, window_bounds = array<i64: 32, 32>}, {pipeline_mode = #tpu.pipeline_mode<synchronous>, transform_indices = @transform_5, window_bounds = array<i64: 1, 32>}, {pipeline_mode = #tpu.pipeline_mode<synchronous>, transform_indices = @transform_6, window_bounds = array<i64: 32, 8>}, {pipeline_mode = #tpu.pipeline_mode<synchronous>, transform_indices = @transform_7, window_bounds = array<i64: 1, 8>}, {transform_indices = @transform_8, window_bounds = array<i64: 16, 1>}]} {
    %c0 = arith.constant 0 : index
    %c0_0 = arith.constant 0 : index
    %0 = vector.load %arg1[%c0, %c0_0] : memref<16x16xbf16, #tpu.memory_space<vmem>>, vector<16x16xbf16>
    %c0_1 = arith.constant 0 : index
    %c0_2 = arith.constant 0 : index
    %1 = vector.load %arg3[%c0_1, %c0_2] : memref<16x32xbf16, #tpu.memory_space<vmem>>, vector<16x32xbf16>
    %cst = arith.constant dense<0.000000e+00> : vector<16x32xf32>
    %2 = tpu.matmul %0, %1, %cst {dimension_numbers = #tpu.dot_dimension_numbers<[1], [0], [0], [1], [0, 0, 1, 1], [], []>} : vector<16x16xbf16>, vector<16x32xbf16>, vector<16x32xf32> -> vector<16x32xf32>
    %c0_3 = arith.constant 0 : index
    %c0_4 = arith.constant 0 : index
    %3 = vector.load %arg4[%c0_3, %c0_4] : memref<1x32xf32, #tpu.memory_space<vmem>>, vector<1x32xf32>
    %4 = vector.broadcast %3 : vector<1x32xf32> to vector<16x32xf32>
    %5 = arith.addf %2, %4 : vector<16x32xf32>
    %cst_5 = arith.constant 0.000000e+00 : f32
    %6 = vector.broadcast %cst_5 : f32 to vector<16x32xf32>
    %7 = arith.maximumf %5, %6 : vector<16x32xf32>
    %8 = arith.truncf %7 : vector<16x32xf32> to vector<16x32xbf16>
    %c0_6 = arith.constant 0 : index
    %c0_7 = arith.constant 0 : index
    %9 = vector.load %arg5[%c0_6, %c0_7] : memref<32x32xbf16, #tpu.memory_space<vmem>>, vector<32x32xbf16>
    %cst_8 = arith.constant dense<0.000000e+00> : vector<16x32xf32>
    %10 = tpu.matmul %8, %9, %cst_8 {dimension_numbers = #tpu.dot_dimension_numbers<[1], [0], [0], [1], [0, 0, 1, 1], [], []>} : vector<16x32xbf16>, vector<32x32xbf16>, vector<16x32xf32> -> vector<16x32xf32>
    %c0_9 = arith.constant 0 : index
    %c0_10 = arith.constant 0 : index
    %11 = vector.load %arg6[%c0_9, %c0_10] : memref<1x32xf32, #tpu.memory_space<vmem>>, vector<1x32xf32>
    %12 = vector.broadcast %11 : vector<1x32xf32> to vector<16x32xf32>
    %13 = arith.addf %10, %12 : vector<16x32xf32>
    %cst_11 = arith.constant 0.000000e+00 : f32
    %14 = vector.broadcast %cst_11 : f32 to vector<16x32xf32>
    %15 = arith.maximumf %13, %14 : vector<16x32xf32>
    %16 = arith.truncf %15 : vector<16x32xf32> to vector<16x32xbf16>
    %c0_12 = arith.constant 0 : index
    %c0_13 = arith.constant 0 : index
    %17 = vector.load %arg7[%c0_12, %c0_13] : memref<32x8xbf16, #tpu.memory_space<vmem>>, vector<32x8xbf16>
    %cst_14 = arith.constant dense<0.000000e+00> : vector<16x8xf32>
    %18 = tpu.matmul %16, %17, %cst_14 {dimension_numbers = #tpu.dot_dimension_numbers<[1], [0], [0], [1], [0, 0, 1, 1], [], []>} : vector<16x32xbf16>, vector<32x8xbf16>, vector<16x8xf32> -> vector<16x8xf32>
    %c0_15 = arith.constant 0 : index
    %c0_16 = arith.constant 0 : index
    %19 = vector.load %arg8[%c0_15, %c0_16] : memref<1x8xf32, #tpu.memory_space<vmem>>, vector<1x8xf32>
    %20 = vector.broadcast %19 : vector<1x8xf32> to vector<16x8xf32>
    %21 = arith.addf %18, %20 : vector<16x8xf32>
    %cst_17 = arith.constant 0.000000e+00 : f32
    %22 = vector.broadcast %cst_17 : f32 to vector<16x8xf32>
    %23 = arith.maximumf %21, %22 : vector<16x8xf32>
    %cst_18 = arith.constant dense<0xFF800000> : vector<16xf32>
    %24 = vector.multi_reduction <maximumf>, %23, %cst_18 [1] : vector<16x8xf32> to vector<16xf32>
    %25 = vector.shape_cast %24 : vector<16xf32> to vector<16x1xf32>
    %26 = vector.broadcast %25 : vector<16x1xf32> to vector<16x8xf32>
    %27 = arith.subf %23, %26 : vector<16x8xf32>
    %28 = math.exp %27 : vector<16x8xf32>
    %cst_19 = arith.constant dense<0.000000e+00> : vector<16xf32>
    %29 = vector.multi_reduction <add>, %28, %cst_19 [1] : vector<16x8xf32> to vector<16xf32>
    %30 = vector.shape_cast %29 : vector<16xf32> to vector<16x1xf32>
    %31 = math.log %30 : vector<16x1xf32>
    %32 = arith.addf %25, %31 : vector<16x1xf32>
    %33 = tpu.iota {dimensions = array<i32: 1>} : vector<16x8xi32>
    %c0_20 = arith.constant 0 : index
    %c0_21 = arith.constant 0 : index
    %34 = vector.load %arg2[%c0_20, %c0_21] : memref<16x1xi32, #tpu.memory_space<vmem>>, vector<16x1xi32>
    %35 = vector.broadcast %34 : vector<16x1xi32> to vector<16x8xi32>
    %36 = arith.cmpi eq, %33, %35 : vector<16x8xi32>
    %cst_22 = arith.constant 0.000000e+00 : f32
    %37 = vector.broadcast %cst_22 : f32 to vector<16x8xf32>
    %38 = arith.select %36, %23, %37 : vector<16x8xi1>, vector<16x8xf32>
    %cst_23 = arith.constant dense<0.000000e+00> : vector<16xf32>
    %39 = vector.multi_reduction <add>, %38, %cst_23 [1] : vector<16x8xf32> to vector<16xf32>
    %40 = vector.shape_cast %39 : vector<16xf32> to vector<16x1xf32>
    %41 = arith.subf %40, %32 : vector<16x1xf32>
    %c0_24 = arith.constant 0 : index
    %c0_25 = arith.constant 0 : index
    %42 = vector.load %arg9[%c0_24, %c0_25] : memref<16x1xf32, #tpu.memory_space<vmem>>, vector<16x1xf32>
    tpu.vector_store %arg9[%c0_24, %c0_25], %41 {strides = array<i32>} : memref<16x1xf32, #tpu.memory_space<vmem>>, vector<16x1xf32>,
    return
  }
  func.func @transform_0(%arg0: i32) -> (i32, i32) {
    %c0_i32 = arith.constant 0 : i32
    %c0_i32_0 = arith.constant 0 : i32
    return %arg0, %c0_i32 : i32, i32
  }
  func.func @transform_1(%arg0: i32) -> (i32, i32) {
    %c0_i32 = arith.constant 0 : i32
    %c0_i32_0 = arith.constant 0 : i32
    return %arg0, %c0_i32 : i32, i32
  }
  func.func @transform_2(%arg0: i32) -> (i32, i32) {
    %c0_i32 = arith.constant 0 : i32
    %c0_i32_0 = arith.constant 0 : i32
    %c0_i32_1 = arith.constant 0 : i32
    return %c0_i32, %c0_i32_0 : i32, i32
  }
  func.func @transform_3(%arg0: i32) -> (i32, i32) {
    %c0_i32 = arith.constant 0 : i32
    %c0_i32_0 = arith.constant 0 : i32
    %c0_i32_1 = arith.constant 0 : i32
    return %c0_i32, %c0_i32_0 : i32, i32
  }
  func.func @transform_4(%arg0: i32) -> (i32, i32) {
    %c0_i32 = arith.constant 0 : i32
    %c0_i32_0 = arith.constant 0 : i32
    %c0_i32_1 = arith.constant 0 : i32
    return %c0_i32, %c0_i32_0 : i32, i32
  }
  func.func @transform_5(%arg0: i32) -> (i32, i32) {
    %c0_i32 = arith.constant 0 : i32
    %c0_i32_0 = arith.constant 0 : i32
    %c0_i32_1 = arith.constant 0 : i32
    return %c0_i32, %c0_i32_0 : i32, i32
  }
  func.func @transform_6(%arg0: i32) -> (i32, i32) {
    %c0_i32 = arith.constant 0 : i32
    %c0_i32_0 = arith.constant 0 : i32
    %c0_i32_1 = arith.constant 0 : i32
    return %c0_i32, %c0_i32_0 : i32, i32
  }
  func.func @transform_7(%arg0: i32) -> (i32, i32) {
    %c0_i32 = arith.constant 0 : i32
    %c0_i32_0 = arith.constant 0 : i32
    %c0_i32_1 = arith.constant 0 : i32
    return %c0_i32, %c0_i32_0 : i32, i32
  }
  func.func @transform_8(%arg0: i32) -> (i32, i32) {
    %c0_i32 = arith.constant 0 : i32
    %c0_i32_0 = arith.constant 0 : i32
    return %arg0, %c0_i32 : i32, i32
  }
}

</mosaic_0001>

<llo_original>
// kernel: tpu_custom_call.1
$region0: #{tpu_custom_call.1}
  #allocation0 [shape = 'u32[]', space=smem, size = 0x4, offset = 0x4, fixed_abs, tag = 'smem constant byte address 0x4 - core index']
  #allocation1 [shape = 'u32[72,128]{1,0:T(1,128)}', space=vmem, size = 0x9000, scoped, tag = 'internal scratch']
  %s0 = inlined_call_operand.vmem [shape: bf16[16,16], index: 0, kind: input, shape index: {}]
  %s1 = inlined_call_operand.vmem [shape: s32[16,1], index: 1, kind: input, shape index: {}]
  %s2 = inlined_call_operand.vmem [shape: bf16[16,32], index: 2, kind: input, shape index: {}]
  %s3 = inlined_call_operand.vmem [shape: f32[1,32], index: 3, kind: input, shape index: {}]
  %s4 = inlined_call_operand.vmem [shape: bf16[32,32], index: 4, kind: input, shape index: {}]
  %s5 = inlined_call_operand.vmem [shape: f32[1,32], index: 5, kind: input, shape index: {}]
  %s6 = inlined_call_operand.vmem [shape: bf16[32,8], index: 6, kind: input, shape index: {}]
  %s7 = inlined_call_operand.vmem [shape: f32[1,8], index: 7, kind: input, shape index: {}]
  %s8 = inlined_call_operand.vmem [shape: f32[16,1], index: 8, kind: output, shape index: {}]
  %s9 = sld [smem:[#allocation0]]
  $region42: #{tpu_custom_call.1} parent=0
    _
  %s11 = ssub.s32 1, %s9
  %s12 = scalar_select 0, %s11, %s9
  // Predicated region
  $region2: #{tpu_custom_call.1} parent=0 // pred_check
    _
  $region3: #{tpu_custom_call.1} parent=0 // pred_check_branch
    %14 = sbr.rel (0) target = $region5
  $region4: #{tpu_custom_call.1} parent=0 // pred_region
    _
  $region5: #{tpu_custom_call.1} parent=0 // pred_fallthru
    _
  // Predicated region
  $region6: #{tpu_custom_call.1} parent=0 // pred_check
    _
  $region7: #{tpu_custom_call.1} parent=0 // pred_check_branch
    %16 = sbr.rel (0) target = $region9
  $region8: #{tpu_custom_call.1} parent=0 // pred_region
    _
  $region9: #{tpu_custom_call.1} parent=0 // pred_fallthru
    _
  // Predicated region
  $region10: #{tpu_custom_call.1} parent=0 // pred_check
    _
  $region11: #{tpu_custom_call.1} parent=0 // pred_check_branch
    %18 = sbr.rel (0) target = $region13
  $region12: #{tpu_custom_call.1} parent=0 // pred_region
    _
  $region13: #{tpu_custom_call.1} parent=0 // pred_fallthru
    _
  // Predicated region
  $region14: #{tpu_custom_call.1} parent=0 // pred_check
    _
  $region15: #{tpu_custom_call.1} parent=0 // pred_check_branch
    %20 = sbr.rel (0) target = $region17
  $region16: #{tpu_custom_call.1} parent=0 // pred_region
    _
  $region17: #{tpu_custom_call.1} parent=0 // pred_fallthru
    _
  // Predicated region
  $region18: #{tpu_custom_call.1} parent=0 // pred_check
    _
  $region19: #{tpu_custom_call.1} parent=0 // pred_check_branch
    %22 = sbr.rel (0) target = $region21
  $region20: #{tpu_custom_call.1} parent=0 // pred_region
    _
  $region21: #{tpu_custom_call.1} parent=0 // pred_fallthru
    _
  // Predicated region
  $region22: #{tpu_custom_call.1} parent=0 // pred_check
    _
  $region23: #{tpu_custom_call.1} parent=0 // pred_check_branch
    %24 = sbr.rel (0) target = $region25
  $region24: #{tpu_custom_call.1} parent=0 // pred_region
    _
  $region25: #{tpu_custom_call.1} parent=0 // pred_fallthru
    _
  // Predicated region
  $region26: #{tpu_custom_call.1} parent=0 // pred_check
    _
  $region27: #{tpu_custom_call.1} parent=0 // pred_check_branch
    %26 = sbr.rel (0) target = $region29
  $region28: #{tpu_custom_call.1} parent=0 // pred_region
    _
  $region29: #{tpu_custom_call.1} parent=0 // pred_fallthru
    _
  // Predicated region
  $region30: #{tpu_custom_call.1} parent=0 // pred_check
    _
  $region31: #{tpu_custom_call.1} parent=0 // pred_check_branch
    %28 = sbr.rel (0) target = $region33
  $region32: #{tpu_custom_call.1} parent=0 // pred_region
    _
  $region33: #{tpu_custom_call.1} parent=0 // pred_fallthru
    _
  %v30 = vld [vmem:[%s0] sm:$0xf]
  %v31 = vld [vmem:[%s0 + $0x4] sm:$0xf]
  %v32 = vld [vmem:[%s2] sm:$0xf]
  %v33 = vld [vmem:[%s2 + $0x4] sm:$0xf]
  %v34 = vld [vmem:[%s3] sm:$0x1]
  %v36 = vperm.slane %v34, 0
  %v40 = vunpack.c.l.b16 %v30
  %v41 = vunpack.c.l.b16 %v31
  %v42 = vpack.c.b16 %v41, %v40
  %v45 = vunpack.c.l.b16 %v32
  %v46 = vunpack.c.l.b16 %v33
  %v47 = vpack.c.b16 %v46, %v45
  %vm49 = vcmask 130048
  %v51 = vsel %vm49, %v42, 0
  %53 = vmatpush.bf16.msra.mxu0 0
  %54 = vmatpush.bf16.msra.mxu0 0
  %55 = vmatpush.bf16.msra.mxu0 0
  %56 = vmatpush.bf16.msra.mxu0 0
  %57 = vmatpush.bf16.msra.mxu0 0
  %58 = vmatpush.bf16.msra.mxu0 0
  %59 = vmatpush.bf16.msra.mxu0 0
  %60 = vmatpush.bf16.msra.mxu0 %v47
  %61 = vmatmul.bf16.gmra.mxu0 %v51
  %v62 = vpop.f32.mrf.mxu0
  %v63 = vadd.f32 %v36, %v62
  %v64 = vpop.f32.mrf.mxu0
  %v65 = vadd.f32 %v36, %v64
  %66 = vdwg.mxu0
  %v67 = vmax.f32 %v63, 0.0
  %v68 = vmax.f32 %v65, 0.0
  %v69 = vpack.c.bf16 %v68, %v67
  %v70 = vld [vmem:[%s4] sm:$0xf]
  %v71 = vld [vmem:[%s4 + $0x4] sm:$0xf]
  %v72 = vld [vmem:[%s4 + $0x8] sm:$0xf]
  %v73 = vld [vmem:[%s4 + $0xc] sm:$0xf]
  %v74 = vld [vmem:[%s5] sm:$0x1]
  %v76 = vperm.slane %v74, 0
  %v82 = vunpack.c.l.b16 %v70
  %v83 = vunpack.c.l.b16 %v71
  %v84 = vunpack.c.l.b16 %v72
  %v85 = vunpack.c.l.b16 %v73
  %v86 = vpack.c.b16 %v83, %v82
  %v87 = vpack.c.b16 %v85, %v84
  %vm90 = vcmask 261120
  %v92 = vsel %vm90, %v69, 0
  %94 = vmatpush.bf16.msra.mxu0 0
  %95 = vmatpush.bf16.msra.mxu0 0
  %96 = vmatpush.bf16.msra.mxu0 0
  %97 = vmatpush.bf16.msra.mxu0 0
  %98 = vmatpush.bf16.msra.mxu0 0
  %99 = vmatpush.bf16.msra.mxu0 0
  %100 = vmatpush.bf16.msra.mxu0 %v87
  %101 = vmatpush.bf16.msra.mxu0 %v86
  %102 = vmatmul.bf16.gmra.mxu0 %v92
  %v103 = vpop.f32.mrf.mxu0
  %v104 = vadd.f32 %v76, %v103
  %v105 = vpop.f32.mrf.mxu0
  %v106 = vadd.f32 %v76, %v105
  %107 = vdwg.mxu0
  %v108 = vmax.f32 %v104, 0.0
  %v109 = vmax.f32 %v106, 0.0
  %v110 = vpack.c.bf16 %v109, %v108
  %v111 = vld [vmem:[%s6] sm:$0xf]
  %v112 = vld [vmem:[%s6 + $0x4] sm:$0xf]
  %v113 = vld [vmem:[%s6 + $0x8] sm:$0xf]
  %v114 = vld [vmem:[%s6 + $0xc] sm:$0xf]
  %v115 = vld [vmem:[%s7] sm:$0x1]
  %v117 = vperm.slane %v115, 0
  %v123 = vunpack.c.l.b16 %v111
  %v124 = vunpack.c.l.b16 %v112
  %v125 = vunpack.c.l.b16 %v113
  %v126 = vunpack.c.l.b16 %v114
  %v127 = vpack.c.b16 %v124, %v123
  %v128 = vpack.c.b16 %v126, %v125
  %v132 = vsel %vm90, %v110, 0
  %134 = vmatpush.bf16.msra.mxu0 0
  %135 = vmatpush.bf16.msra.mxu0 0
  %136 = vmatpush.bf16.msra.mxu0 0
  %137 = vmatpush.bf16.msra.mxu0 0
  %138 = vmatpush.bf16.msra.mxu0 0
  %139 = vmatpush.bf16.msra.mxu0 0
  %140 = vmatpush.bf16.msra.mxu0 %v128
  %141 = vmatpush.bf16.msra.mxu0 %v127
  %142 = vmatmul.bf16.gmra.mxu0 %v132
  %v143 = vpop.f32.mrf.mxu0
  %v144 = vadd.f32 %v117, %v143
  %v145 = vpop.f32.mrf.mxu0
  %v146 = vadd.f32 %v117, %v145
  %147 = vdwg.mxu0
  %v148 = vmax.f32 %v144, 0.0
  %v149 = vmax.f32 %v146, 0.0
  %vm150 = vcmask 64512
  %v151 = vsel %vm150, %v148, -inf
  %152 = vmax.xlane.f32.xlu0 %v151
  %v153 = vpop.xlane.xlu0 %152
  %v154 = vsel %vm150, %v149, -inf
  %155 = vmax.xlane.f32.xlu0 %v154
  %v156 = vpop.xlane.xlu0 %155
  %v157 = vsub.f32 %v148, %v153
  %v158 = vsub.f32 %v149, %v156
  %v159 = vmul.f32 %v157, 1.442695
  %v160 = vpow.pop %v159
  %v161 = vmul.f32 %v158, 1.442695
  %v162 = vpow.pop %v161
  %v163 = vsel %vm150, %v160, 0.0
  %164 = vadd.xlane.f32.xlu0 %v163
  %v165 = vpop.xlane.xlu0 %164
  %v166 = vsel %vm150, %v162, 0.0
  %167 = vadd.xlane.f32.xlu0 %v166
  %v168 = vpop.xlane.xlu0 %167
  %v169 = vlog2.pop %v165
  %v170 = vmul.f32 %v169, 0.6931472
  %v171 = vlog2.pop %v168
  %v172 = vmul.f32 %v171, 0.6931472
  %v173 = vadd.f32 %v153, %v170
  %v174 = vadd.f32 %v156, %v172
  %v175 = vlaneseq
  %v176 = vand.u32 %v175, 127
  %v177 = vld [vmem:[%s1] sm:$0xff]
  %v178 = vld [vmem:[%s1 + $0x8] sm:$0xff]
  %179 = vset.pattern.permute.xlu0 0
  %180 = vperm.xlu0 %179, %v177
  %v181 = vpop.permute.xlu0 %180
  %182 = vset.pattern.permute.xlu0 0
  %183 = vperm.xlu0 %182, %v178
  %v184 = vpop.permute.xlu0 %183
  %vm185 = vcmp.eq.s32.totalorder %v176, %v181
  %vm186 = vcmp.eq.s32.totalorder %v176, %v184
  %v187 = vsel %vm185, %v148, 0.0
  %v188 = vsel %vm186, %v149, 0.0
  %v189 = vsel %vm150, %v187, 0.0
  %190 = vadd.xlane.f32.xlu0 %v189
  %v191 = vpop.xlane.xlu0 %190
  %v192 = vsel %vm150, %v188, 0.0
  %193 = vadd.xlane.f32.xlu0 %v192
  %v194 = vpop.xlane.xlu0 %193
  %v195 = vsub.f32 %v191, %v173
  %v196 = vsub.f32 %v194, %v174
  %vm197 = vcmask 7168
  %198 = vst.msk [vmem:[%s8] sm:$0xff] %vm197, %v195
  %199 = vst.msk [vmem:[%s8 + $0x8] sm:$0xff] %vm197, %v196
  // Predicated region
  $region34: #{tpu_custom_call.1} parent=0 // pred_check
    _
  $region35: #{tpu_custom_call.1} parent=0 // pred_check_branch
    %201 = sbr.rel (0) target = $region37
  $region36: #{tpu_custom_call.1} parent=0 // pred_region
    _
  $region37: #{tpu_custom_call.1} parent=0 // pred_fallthru
    _
  // Predicated region
  $region38: #{tpu_custom_call.1} parent=0 // pred_check
    _
  $region39: #{tpu_custom_call.1} parent=0 // pred_check_branch
    %203 = sbr.rel (0) target = $region41
  $region40: #{tpu_custom_call.1} parent=0 // pred_region
    _
  $region41: #{tpu_custom_call.1} parent=0 // pred_fallthru
    _

</llo_original>
